<compile_context>
chip_gen: v5e
topology: v5e:2x2
jax: 0.10.0
libtpu: 0.0.40
codegen_flags: <defaults>
</compile_context>

<pallas_src>
import math
from functools import partial

import jax
import jax.numpy as jnp
from jax.experimental import pallas as pl
from jax.experimental.pallas import tpu as pltpu


def _round_up(x, m):
    return ((x + m - 1) // m) * m


def _cdiv(a, b):
    return (a + b - 1) // b


def _vmem_capacity_bytes():
    """Physical VMEM per TensorCore; conservative fallback = v7x (64 MiB)."""
    try:
        info = pltpu.get_tpu_info()
        cap = getattr(info, "vmem_capacity_bytes", None)
        if cap:
            return int(cap)
    except Exception:
        pass
    return 64 * 1024 * 1024


# --------------------------------------------------------------------------
# Kernels
# --------------------------------------------------------------------------

def _linear_kernel_single_k(x_ref, w_ref, b_ref, o_ref, *, std_init):
    # x_ref: (TM, K)   activations tile (whole K in one tile)
    # w_ref: (K, TN)   weight tile in canonical (in_dim, out_dim) layout
    # b_ref: (1, TN)   fused bias = std_init*bias + bias_init  (f32)
    # o_ref: (TM, TN)  output tile
    acc = jnp.dot(x_ref[...], w_ref[...], preferred_element_type=jnp.float32)
    if std_init != 1.0:  # trace-time Python constant; folded away when == 1
        acc = acc * jnp.float32(std_init)
    o_ref[...] = (acc + b_ref[...].astype(jnp.float32)).astype(o_ref.dtype)


def _linear_kernel_tiled_k(x_ref, w_ref, b_ref, o_ref, acc_ref, *, std_init):
    # Same as above but K is tiled: f32 accumulator resident across the K axis.
    k = pl.program_id(2)

    @pl.when(k == 0)
    def _():
        acc_ref[...] = jnp.zeros_like(acc_ref)

    acc_ref[...] += jnp.dot(x_ref[...], w_ref[...],
                            preferred_element_type=jnp.float32)

    @pl.when(k == pl.num_programs(2) - 1)
    def _():
        acc = acc_ref[...]
        if std_init != 1.0:
            acc = acc * jnp.float32(std_init)
        o_ref[...] = (acc + b_ref[...].astype(jnp.float32)).astype(o_ref.dtype)


# --------------------------------------------------------------------------
# Wrapper
# --------------------------------------------------------------------------

def linear_layer_forward(x, weight, bias, std_init=1.0, bias_init=0.0, *,
                         weight_layout="out_in", compute_dtype=None,
                         out_dtype=None, max_single_tile_k=2048, tk=512,
                         tn_cap=1024):
    """LinearLayer.forward.

    x: (..., in_dim)
    weight: (out_dim, in_dim) if weight_layout == "out_in" (PyTorch layout),
            (in_dim, out_dim) if weight_layout == "in_out".
    bias: (out_dim,)

    Pass bf16 x / weight (or compute_dtype=jnp.bfloat16) for ~2x MXU rate and
    half the HBM traffic; accumulation stays f32.
    """
    std_init = float(std_init)
    bias_init = float(bias_init)

    orig_shape = x.shape
    K = orig_shape[-1]
    if weight_layout == "out_in":
        N = weight.shape[0]
        assert weight.shape[1] == K, "weight must be (out_dim, in_dim)"
        # One-time O(K*N) relayout; store weights as (K, N) at init to skip it.
        w_kn = weight.T
    else:
        N = weight.shape[1]
        assert weight.shape[0] == K, "weight must be (in_dim, out_dim)"
        w_kn = weight

    x2d = x.reshape(-1, K)
    M = x2d.shape[0]

    if compute_dtype is not None:
        # NOTE: casting x here is an extra HBM pass; prefer feeding bf16 x.
        x2d = x2d.astype(compute_dtype)
        w_kn = w_kn.astype(compute_dtype)

    if out_dtype is None:
        out_dtype = x.dtype

    # Fold scale/shift into a single f32 fused bias (tiny O(out_dim) op).
    fused_bias = (std_init * bias.astype(jnp.float32) + bias_init).reshape(1, N)

    in_bytes = jnp.dtype(x2d.dtype).itemsize
    w_bytes = jnp.dtype(w_kn.dtype).itemsize
    out_bytes = jnp.dtype(out_dtype).itemsize
    # Sublane multiple: 16 when any streamed operand is sub-32-bit.
    sub = 16 if min(in_bytes, w_bytes, out_bytes) < 4 else 8

    # ---- K tiling: single-tile fast path when K fits; else find a divisor. --
    k_pad = 0
    if K <= max_single_tile_k:
        TK = K                      # full-extent block dim (no padding needed)
        gk = 1
    else:
        TK = 0
        for cand in range(min(tk, (K // 128) * 128), 127, -128):
            if K % cand == 0:       # prefer a divisor -> no K padding
                TK = cand
                break
        if TK == 0:
            TK = tk
            k_pad = _round_up(K, TK) - K
        gk = _cdiv(K + k_pad, TK)

    if k_pad:
        # Zero-padding along K is benign for the contraction (rare path).
        x2d = jnp.pad(x2d, ((0, 0), (0, k_pad)))
        w_kn = jnp.pad(w_kn, ((0, k_pad), (0, 0)))

    # ---- N tiling: full extent when it fits a lane-reasonable tile. ---------
    TN = N if N <= tn_cap else 512
    gn = _cdiv(N, TN)

    # ---- VMEM budget (generation-aware) and TM selection. -------------------
    vmem_cap = _vmem_capacity_bytes()
    ws_budget = int(vmem_cap * 0.70)          # ~45 MiB v7x, ~90 MiB v5e/v6e
    vmem_limit = max(ws_budget,
                     min(vmem_cap - (4 << 20), ws_budget + (16 << 20)))

    tm_cap = max(sub, _round_up(M, sub))
    TM = sub
    for cand in (8192, 4096, 2048, 1024, 512, 256, 128, 64, 32, 16, 8):
        tm_c = _round_up(min(cand, tm_cap), sub)
        ws = (2 * tm_c * TK * in_bytes          # x tile, double-buffered
              + 2 * TK * TN * w_bytes           # w tile, double-buffered
              + 2 * tm_c * TN * out_bytes       # out tile, double-buffered
              + 2 * TN * 4                      # fused bias
              + (tm_c * TN * 4 if gk > 1 else 0))  # f32 accumulator
        if ws <= ws_budget:
            TM = tm_c
            break
    gm = _cdiv(M, TM)

    # v7x megacore: make sure both TensorCores get a block along the
    # "parallel" axes when there is enough work (harmless on v5e/v6e).
    if gn == 1 and gm == 1 and M >= 128:
        TM = _round_up(_cdiv(M, 2), sub)
        gm = _cdiv(M, TM)

    cost = pl.CostEstimate(
        flops=2 * M * K * N,
        transcendentals=0,
        bytes_accessed=(M * K * in_bytes + K * N * w_bytes
                        + M * N * out_bytes + N * 4))

    # TODO(synk): if xprof shows exposed DMA waits on the x/output streams,
    # add pipeline_mode=pl.Buffered(3) on the x BlockSpec (re-check VMEM on v7x).
    if gk == 1:
        out = pl.pallas_call(
            partial(_linear_kernel_single_k, std_init=std_init),
            out_shape=jax.ShapeDtypeStruct((M, N), out_dtype),
            grid_spec=pltpu.PrefetchScalarGridSpec(
                num_scalar_prefetch=0,
                grid=(gm, gn),
                in_specs=[
                    pl.BlockSpec((TM, TK), lambda i, j: (i, 0)),
                    pl.BlockSpec((TK, TN), lambda i, j: (0, j)),
                    pl.BlockSpec((1, TN), lambda i, j: (0, j)),
                ],
                out_specs=pl.BlockSpec((TM, TN), lambda i, j: (i, j)),
            ),
            compiler_params=pltpu.CompilerParams(
                dimension_semantics=("parallel", "parallel"),
                vmem_limit_bytes=vmem_limit),
            cost_estimate=cost,
        )(x2d, w_kn, fused_bias)
    else:
        out = pl.pallas_call(
            partial(_linear_kernel_tiled_k, std_init=std_init),
            out_shape=jax.ShapeDtypeStruct((M, N), out_dtype),
            grid_spec=pltpu.PrefetchScalarGridSpec(
                num_scalar_prefetch=0,
                grid=(gm, gn, gk),
                in_specs=[
                    pl.BlockSpec((TM, TK), lambda i, j, k: (i, k)),
                    pl.BlockSpec((TK, TN), lambda i, j, k: (k, j)),
                    pl.BlockSpec((1, TN), lambda i, j, k: (0, j)),
                ],
                out_specs=pl.BlockSpec((TM, TN), lambda i, j, k: (i, j)),
                scratch_shapes=[pltpu.VMEM((TM, TN), jnp.float32)],
            ),
            compiler_params=pltpu.CompilerParams(
                dimension_semantics=("parallel", "parallel", "arbitrary"),
                vmem_limit_bytes=vmem_limit),
            cost_estimate=cost,
        )(x2d, w_kn, fused_bias)

    return out.reshape(*orig_shape[:-1], N)


# --------------------------------------------------------------------------
# Parameter init (matches LinearLayer.__init__ distributions)
# --------------------------------------------------------------------------

def init_linear_layer_params(key, in_dim, out_dim,
                             freq_init=False, is_first=False,
                             dtype=jnp.float32):
    """Deterministic re-implementation of LinearLayer.__init__ param init.

    Returns weight in PyTorch (out_dim, in_dim) layout; pre-transpose to
    (in_dim, out_dim) and use weight_layout="in_out" to skip the per-call
    relayout in linear_layer_forward.
    """
    kw, kb = jax.random.split(key)
    if is_first:
        bound = 1.0 / in_dim
        weight = jax.random.uniform(kw, (out_dim, in_dim), dtype,
                                    minval=-bound, maxval=bound)
    elif freq_init:
        bound = math.sqrt(6.0 / in_dim) / 25.0
        weight = jax.random.uniform(kw, (out_dim, in_dim), dtype,
                                    minval=-bound, maxval=bound)
    else:
        # kaiming_normal_(a=0.2, fan_in, leaky_relu): std = gain / sqrt(fan_in)
        gain = math.sqrt(2.0 / (1.0 + 0.2 ** 2))
        std = gain / math.sqrt(in_dim)
        weight = 0.25 * std * jax.random.normal(kw, (out_dim, in_dim), dtype)
    b_bound = math.sqrt(1.0 / in_dim)
    bias = jax.random.uniform(kb, (out_dim,), dtype,
                              minval=-b_bound, maxval=b_bound)
    return weight, bias


if __name__ == "__main__":
    key = jax.random.PRNGKey(0)
    k1, k2, k3, k4, k5, k6 = jax.random.split(key, 6)

    # --- 1) small f32 case at shapes consistent with the module -------------
    batch, seq, in_dim, out_dim = 2, 8, 32, 32
    std_init, bias_init = 0.5, 0.1
    x = jax.random.normal(k1, (batch, seq, in_dim), jnp.float32)
    weight, bias = init_linear_layer_params(k2, in_dim, out_dim)

    out = linear_layer_forward(x, weight, bias,
                               std_init=std_init, bias_init=bias_init)
    out = jax.block_until_ready(out)
    ref = std_init * (jnp.einsum("bsd,nd->bsn", x, weight) + bias) + bias_init
    assert out.shape == (batch, seq, out_dim)
    assert jnp.allclose(out, ref, atol=1e-4, rtol=1e-4)

    # --- 2) non-(8,128)-aligned dims + forced K-tiling (accumulator path) ---
    in2, out2 = 640, 200
    x2 = jax.random.normal(k3, (3, 7, in2), jnp.float32)
    w2, b2 = init_linear_layer_params(k4, in2, out2)
    o2 = linear_layer_forward(x2, w2, b2, std_init=1.3, bias_init=-0.2,
                              max_single_tile_k=256, tk=512)
    o2 = jax.block_until_ready(o2)
    ref2 = 1.3 * (jnp.einsum("bsd,nd->bsn", x2, w2) + b2) + (-0.2)
    assert o2.shape == (3, 7, out2)
    assert jnp.allclose(o2, ref2, atol=2e-4, rtol=2e-4)

    # --- 3) bf16 activations/weights (native MXU path), f32 accumulation ----
    in3, out3 = 64, 96
    x3 = jax.random.normal(k5, (2, 128, in3), jnp.float32).astype(jnp.bfloat16)
    w3, b3 = init_linear_layer_params(k6, in3, out3)
    w3 = w3.astype(jnp.bfloat16)
    o3 = linear_layer_forward(x3, w3, b3, std_init=0.7, bias_init=0.05,
                              out_dtype=jnp.float32)
    o3 = jax.block_until_ready(o3)
    ref3 = 0.7 * (jnp.einsum("bsd,nd->bsn", x3.astype(jnp.float32),
                             w3.astype(jnp.float32)) + b3) + 0.05
    assert o3.shape == (2, 128, out3)
    assert jnp.allclose(o3, ref3, atol=1e-2, rtol=1e-2)

    print("KERNEL_OK")
</pallas_src>

<mosaic_0001>
module attributes {stable_mosaic.version = 11 : i64} {
  func.func @_linear_kernel_single_k(%arg0: i32, %arg1: i32, %arg2: memref<16x32xf32, #tpu.memory_space<vmem>>, %arg3: memref<32x32xf32, #tpu.memory_space<vmem>>, %arg4: memref<1x32xf32, #tpu.memory_space<vmem>>, %arg5: memref<16x32xf32, #tpu.memory_space<vmem>>) attributes {dimension_semantics = [#tpu.dimension_semantics<parallel>, #tpu.dimension_semantics<parallel>], iteration_bounds = array<i64: 1, 1>, scalar_prefetch = 0 : i64, scratch_operands = 0 : i64, tpu.core_type = #tpu.core_type<tc>, window_params = [{transform_indices = @transform_0, window_bounds = array<i64: 16, 32>}, {transform_indices = @transform_1, window_bounds = array<i64: 32, 32>}, {transform_indices = @transform_2, window_bounds = array<i64: 1, 32>}, {transform_indices = @transform_3, window_bounds = array<i64: 16, 32>}]} {
    %c0 = arith.constant 0 : index
    %c0_0 = arith.constant 0 : index
    %0 = vector.load %arg2[%c0, %c0_0] : memref<16x32xf32, #tpu.memory_space<vmem>>, vector<16x32xf32>
    %c0_1 = arith.constant 0 : index
    %c0_2 = arith.constant 0 : index
    %1 = vector.load %arg3[%c0_1, %c0_2] : memref<32x32xf32, #tpu.memory_space<vmem>>, vector<32x32xf32>
    %cst = arith.constant dense<0.000000e+00> : vector<16x32xf32>
    %2 = tpu.matmul %0, %1, %cst {dimension_numbers = #tpu.dot_dimension_numbers<[1], [0], [0], [1], [0, 0, 1, 1], [], []>} : vector<16x32xf32>, vector<32x32xf32>, vector<16x32xf32> -> vector<16x32xf32>
    %cst_3 = arith.constant 5.000000e-01 : f32
    %3 = vector.broadcast %cst_3 : f32 to vector<16x32xf32>
    %4 = arith.mulf %2, %3 : vector<16x32xf32>
    %c0_4 = arith.constant 0 : index
    %c0_5 = arith.constant 0 : index
    %5 = vector.load %arg4[%c0_4, %c0_5] : memref<1x32xf32, #tpu.memory_space<vmem>>, vector<1x32xf32>
    %6 = vector.broadcast %5 : vector<1x32xf32> to vector<16x32xf32>
    %7 = arith.addf %4, %6 : vector<16x32xf32>
    %c0_6 = arith.constant 0 : index
    %c0_7 = arith.constant 0 : index
    %8 = vector.load %arg5[%c0_6, %c0_7] : memref<16x32xf32, #tpu.memory_space<vmem>>, vector<16x32xf32>
    tpu.vector_store %arg5[%c0_6, %c0_7], %7 {strides = array<i32>} : memref<16x32xf32, #tpu.memory_space<vmem>>, vector<16x32xf32>,
    return
  }
  func.func @transform_0(%arg0: i32, %arg1: i32) -> (i32, i32) {
    %c0_i32 = arith.constant 0 : i32
    %c0_i32_0 = arith.constant 0 : i32
    return %arg0, %c0_i32 : i32, i32
  }
  func.func @transform_1(%arg0: i32, %arg1: i32) -> (i32, i32) {
    %c0_i32 = arith.constant 0 : i32
    %c0_i32_0 = arith.constant 0 : i32
    return %c0_i32, %arg1 : i32, i32
  }
  func.func @transform_2(%arg0: i32, %arg1: i32) -> (i32, i32) {
    %c0_i32 = arith.constant 0 : i32
    %c0_i32_0 = arith.constant 0 : i32
    return %c0_i32, %arg1 : i32, i32
  }
  func.func @transform_3(%arg0: i32, %arg1: i32) -> (i32, i32) {
    %c0_i32 = arith.constant 0 : i32
    return %arg0, %arg1 : i32, i32
  }
}

</mosaic_0001>

<llo_original>
// kernel: tpu_custom_call.1
$region0: #{tpu_custom_call.1}
  #allocation0 [shape = 'u32[]', space=smem, size = 0x4, offset = 0x4, fixed_abs, tag = 'smem constant byte address 0x4 - core index']
  #allocation1 [shape = 'u32[72,128]{1,0:T(1,128)}', space=vmem, size = 0x9000, scoped, tag = 'internal scratch']
  %s0 = inlined_call_operand.hbm [shape: f32[16,32], index: 0, kind: input, shape index: {}]
  %s1 = inlined_call_operand.hbm [shape: f32[32,32], index: 1, kind: input, shape index: {}]
  %s2 = inlined_call_operand.vmem [shape: f32[1,32], index: 2, kind: input, shape index: {}]
  %s3 = inlined_call_operand.hbm [shape: f32[16,32], index: 3, kind: output, shape index: {}]
  %s4 = sld [smem:[#allocation0]]
  $region30: #{tpu_custom_call.1} parent=0
    _
  %s6 = ssub.s32 1, %s4
  %s7 = scalar_select 0, %s6, %s4
  $region1: #{tpu_custom_call.1} parent=0
    #allocation2 [shape = 'u8[8192]{0}', space=vmem, size = 0x2000, scoped, tag = 'input window, operand 0, single buffered']
    #allocation3 [shape = 's32[1]{0}', space=sflag, size = 0x4, scoped, tag = 'scoped memory for tpu_custom_call.1']
    #allocation4 [shape = 's32[1]{0}', space=sflag, size = 0x4, scoped, tag = 'scoped memory for tpu_custom_call.1']
    #allocation5 [shape = 'u8[16384]{0}', space=vmem, size = 0x4000, scoped, tag = 'input window, operand 1, single buffered']
    #allocation6 [shape = 's32[1]{0}', space=sflag, size = 0x4, scoped, tag = 'scoped memory for tpu_custom_call.1']
    #allocation7 [shape = 'u8[8192]{0}', space=vmem, size = 0x2000, scoped, tag = 'output window, operand 0, single buffered']
    %8 = vsyncpa [#allocation3], 0
    %9 = vsyncpa [#allocation6], 0
    %10 = vsyncpa [#allocation4], 0
    // Predicated region
    $region2: #{tpu_custom_call.1} parent=1 // pred_check
      _
    $region3: #{tpu_custom_call.1} parent=1 // pred_check_branch
      %12 = sbr.rel (0) target = $region5
    $region4: #{tpu_custom_call.1} parent=1 // pred_region
      %14 = vsyncadd [#allocation3], 0
      %s15 = sshll.u32 %s0, 4
      %s16 = int_to_ptr.hbm [resolvable:$true] %s15
      %s17 = sshll.u32 [#allocation2], 4
      %s18 = int_to_ptr.vmem [resolvable:$true] %s17
      %23 = dma.hbm_to_vmem [thread:$0]  %s16, 256, %s18, [#allocation3], 128, 128, 8
    $region5: #{tpu_custom_call.1} parent=1 // pred_fallthru
      _
    // Predicated region
    $region6: #{tpu_custom_call.1} parent=1 // pred_check
      _
    $region7: #{tpu_custom_call.1} parent=1 // pred_check_branch
      %25 = sbr.rel (0) target = $region9
    $region8: #{tpu_custom_call.1} parent=1 // pred_region
      %27 = vsyncadd [#allocation6], 0
      %s28 = sshll.u32 %s1, 4
      %s29 = int_to_ptr.hbm [resolvable:$true] %s28
      %s30 = sshll.u32 [#allocation5], 4
      %s31 = int_to_ptr.vmem [resolvable:$true] %s30
      %36 = dma.hbm_to_vmem [thread:$0]  %s29, 512, %s31, [#allocation6], 128, 128, 8
    $region9: #{tpu_custom_call.1} parent=1 // pred_fallthru
      _
    // Predicated region
    $region10: #{tpu_custom_call.1} parent=1 // pred_check
      _
    $region11: #{tpu_custom_call.1} parent=1 // pred_check_branch
      %38 = sbr.rel (0) target = $region13
    $region12: #{tpu_custom_call.1} parent=1 // pred_region
      _
    $region13: #{tpu_custom_call.1} parent=1 // pred_fallthru
      _
    // Predicated region
    $region14: #{tpu_custom_call.1} parent=1 // pred_check
      _
    $region15: #{tpu_custom_call.1} parent=1 // pred_check_branch
      %40 = sbr.rel (0) target = $region17
    $region16: #{tpu_custom_call.1} parent=1 // pred_region
      %42 = dma.done [#allocation3], 256
    $region17: #{tpu_custom_call.1} parent=1 // pred_fallthru
      _
    // Predicated region
    $region18: #{tpu_custom_call.1} parent=1 // pred_check
      _
    $region19: #{tpu_custom_call.1} parent=1 // pred_check_branch
      %44 = sbr.rel (0) target = $region21
    $region20: #{tpu_custom_call.1} parent=1 // pred_region
      %46 = dma.done [#allocation6], 512
    $region21: #{tpu_custom_call.1} parent=1 // pred_fallthru
      _
    %v47 = vld [vmem:[#allocation2] sm:$0xff]
    %v48 = vld [vmem:[#allocation2 + $0x8] sm:$0xff]
    %v49 = vld [vmem:[#allocation5] sm:$0xff]
    %v50 = vld [vmem:[#allocation5 + $0x8] sm:$0xff]
    %v51 = vld [vmem:[#allocation5 + $0x10] sm:$0xff]
    %v52 = vld [vmem:[#allocation5 + $0x18] sm:$0xff]
    %vm53 = vcmask 261120
    %v55 = vsel %vm53, %v47, 0
    %v58 = vsel %vm53, %v48, 0
    %60 = vmatpush.msra.mxu0 0.0
    %61 = vmatpush.msra.mxu0 0.0
    %62 = vmatpush.msra.mxu0 0.0
    %63 = vmatpush.msra.mxu0 0.0
    %64 = vmatpush.msra.mxu0 0.0
    %65 = vmatpush.msra.mxu0 0.0
    %66 = vmatpush.msra.mxu0 0.0
    %67 = vmatpush.msra.mxu0 0.0
    %68 = vmatpush.msra.mxu0 0.0
    %69 = vmatpush.msra.mxu0 0.0
    %70 = vmatpush.msra.mxu0 0.0
    %71 = vmatpush.msra.mxu0 0.0
    %72 = vmatpush.msra.mxu0 %v52
    %73 = vmatpush.msra.mxu0 %v51
    %74 = vmatpush.msra.mxu0 %v50
    %75 = vmatpush.msra.mxu0 %v49
    %76 = vmatmul.f32.gmra.mxu0 %v55
    %v77 = vpop.f32.mrf.mxu0
    %v78 = vadd.f32 0.0, %v77
    %79 = vmatmul.f32.gmra.mxu0 %v58
    %v80 = vpop.f32.mrf.mxu0
    %v81 = vadd.f32 0.0, %v80
    %82 = vdwg.mxu0
    %v83 = vmul.f32 %v78, 0.5
    %v84 = vmul.f32 %v81, 0.5
    %v85 = vld [vmem:[%s2] sm:$0x1]
    %v87 = vperm.slane %v85, 0
    %v89 = vadd.f32 %v83, %v87
    %v90 = vadd.f32 %v84, %v87
    %91 = vst.msk [vmem:[#allocation7] sm:$0xff] %vm53, %v89
    %92 = vst.msk [vmem:[#allocation7 + $0x8] sm:$0xff] %vm53, %v90
    // Predicated region
    $region22: #{tpu_custom_call.1} parent=1 // pred_check
      _
    $region23: #{tpu_custom_call.1} parent=1 // pred_check_branch
      %94 = sbr.rel (0) target = $region25
    $region24: #{tpu_custom_call.1} parent=1 // pred_region
      %96 = vsyncadd [#allocation4], 0
      %s97 = sshll.u32 [#allocation7], 4
      %s98 = int_to_ptr.vmem [resolvable:$true] %s97
      %s99 = sshll.u32 %s3, 4
      %s100 = int_to_ptr.hbm [resolvable:$true] %s99
      %105 = dma.vmem_to_hbm [thread:$0]  %s98, 256, %s100, [#allocation4], 128, 128, 8
    $region25: #{tpu_custom_call.1} parent=1 // pred_fallthru
      _
    // Predicated region
    $region26: #{tpu_custom_call.1} parent=1 // pred_check
      _
    $region27: #{tpu_custom_call.1} parent=1 // pred_check_branch
      %107 = sbr.rel (0) target = $region29
    $region28: #{tpu_custom_call.1} parent=1 // pred_region
      %109 = dma.done [#allocation4], 256
    $region29: #{tpu_custom_call.1} parent=1 // pred_fallthru
      _
    %110 = vsyncpa [#allocation3], 1
    %111 = vsyncpa [#allocation6], 1
    %112 = vsyncpa [#allocation4], 1

</llo_original>
